<compile_context>
chip_gen: v6e
topology: v6e:2x2x1
jax: 0.10.0
libtpu: 0.0.40
codegen_flags: <defaults>
</compile_context>

<pallas_src>
import math

import jax
import jax.numpy as jnp
from jax.experimental import pallas as pl
from jax.experimental.pallas import tpu as pltpu


def _make_kernel(num_layers: int, d_pad: int, inv_scale: float):
    L, Dp = num_layers, d_pad
    bf16 = jnp.bfloat16
    f32 = jnp.float32

    def kernel(x_ref, a_ref, wq_ref, wkv_ref, o_ref):
        # Refs (batch dim squeezed by the BlockSpec):
        #   x_ref, a_ref, o_ref : (S, Dp)        f32
        #   wq_ref              : (L, Dp, Dp)    bf16  (pre-transposed, bias folded in row D)
        #   wkv_ref             : (Dp, L*2*Dp)   bf16  (all layers' [Wk^T | Wv^T], bias folded)
        a_bf = a_ref[...].astype(bf16)

        # Audio is layer-invariant: one wide K|V projection for all layers at
        # once (fills the MXU output width, off the serial latent dep-chain).
        kv_all = jnp.dot(a_bf, wkv_ref[...], preferred_element_type=f32)   # (S, L*2*Dp)

        latent = x_ref[...]                       # (S, Dp) f32 residual carry

        for l in range(L):                        # static unroll; L is small
            q = jnp.dot(latent.astype(bf16), wq_ref[l],
                        preferred_element_type=f32)                        # (S, Dp)
            k = kv_all[:, (2 * l) * Dp:(2 * l + 1) * Dp]      # 128-aligned static slices
            v = kv_all[:, (2 * l + 1) * Dp:(2 * l + 2) * Dp]

            # attention scores: contract feature axes directly (no transpose)
            scores = jnp.einsum("qd,kd->qk", q.astype(bf16), k.astype(bf16),
                                preferred_element_type=f32) * inv_scale

            # numerically stable softmax in f32; exact division (not EUP-bound)
            m = jnp.max(scores, axis=-1, keepdims=True)
            p = jnp.exp(scores - m)
            probs = p / jnp.sum(p, axis=-1, keepdims=True)

            attn = jnp.einsum("qk,kd->qd", probs.astype(bf16), v.astype(bf16),
                              preferred_element_type=f32)

            latent = attn + latent                # residual (AudioAttentionLayers), f32

        o_ref[...] = latent

    return kernel


def prepare_params(layer_params, feature_dim):
    """One-time packing of per-layer weights into lane-dense bf16 slabs.

    Call once and cache the result: this keeps the pad/transpose/concat/stack
    XLA work out of the per-call hot path.  Weights are PyTorch nn.Linear
    layout (D_out, D_in); biases are folded into weight row D, which pairs
    with a constant-1.0 activation lane at feature index D.
    """
    D = int(feature_dim)
    L = len(layer_params)
    assert D > 0 and L > 0
    # Reserve one extra lane (index D) for the bias lane, then round to 128.
    Dp = ((D + 1 + 127) // 128) * 128
    f32, bf16 = jnp.float32, jnp.bfloat16

    def fold(w, b):
        wt = jnp.zeros((Dp, Dp), f32)
        wt = wt.at[:D, :D].set(jnp.asarray(w, f32).T)   # pre-transpose: (D_in, D_out)
        wt = wt.at[D, :D].set(jnp.asarray(b, f32))      # bias rides the ones-lane row
        return wt

    wq_all = jnp.stack([fold(p["wq"], p["bq"]) for p in layer_params]).astype(bf16)   # (L,Dp,Dp)
    wkv_all = jnp.concatenate(
        [jnp.concatenate([fold(p["wk"], p["bk"]), fold(p["wv"], p["bv"])], axis=1)
         for p in layer_params], axis=1).astype(bf16)                                  # (Dp, L*2*Dp)

    return {"wq_all": wq_all, "wkv_all": wkv_all, "D": D, "Dp": Dp, "L": L}


def audio_attention_layers(latent_code, audio_features, packed):
    """Pallas implementation of AudioAttentionLayers.forward.

    latent_code, audio_features: (B, S, D) float32
    packed: output of prepare_params (cached, per-model).
    """
    assert latent_code.ndim == 3 and audio_features.ndim == 3
    assert latent_code.shape == audio_features.shape
    B, S, D = latent_code.shape
    assert D == packed["D"]
    Dp, L = packed["Dp"], packed["L"]
    f32 = jnp.float32
    inv_scale = 1.0 / math.sqrt(float(D))     # scale uses the true feature_dim

    # Pad feature axis to Dp; lane D is the constant-1.0 bias lane, rest zero.
    # Activations are tiny, so they stay f32 here (residual base stays exact);
    # matmul operands are cast to bf16 inside the kernel.
    def pad_act(x):
        ones = jnp.ones((B, S, 1), f32)
        zeros = jnp.zeros((B, S, Dp - D - 1), f32)
        return jnp.concatenate([x.astype(f32), ones, zeros], axis=-1)

    x_p = pad_act(latent_code)
    a_p = pad_act(audio_features)

    kernel = _make_kernel(L, Dp, inv_scale)

    out_p = pl.pallas_call(
        kernel,
        out_shape=jax.ShapeDtypeStruct((B, S, Dp), f32),
        grid_spec=pltpu.PrefetchScalarGridSpec(
            num_scalar_prefetch=0,
            grid=(B,),                                              # batch-parallel (megacore on v7x)
            in_specs=[
                pl.BlockSpec((None, S, Dp), lambda b: (b, 0, 0)),   # latent (padded)
                pl.BlockSpec((None, S, Dp), lambda b: (b, 0, 0)),   # audio (padded)
                pl.BlockSpec((L, Dp, Dp), lambda b: (0, 0, 0)),     # stacked Wq^T (constant block -> loaded once)
                pl.BlockSpec((Dp, L * 2 * Dp), lambda b: (0, 0)),   # all layers' [Wk^T | Wv^T]
            ],
            out_specs=pl.BlockSpec((None, S, Dp), lambda b: (b, 0, 0)),
        ),
        compiler_params=pltpu.CompilerParams(
            dimension_semantics=("parallel",)),
    )(x_p, a_p, packed["wq_all"], packed["wkv_all"])

    return out_p[:, :, :D]


def _reference(latent_code, audio_features, layer_params):
    """Pure-JAX f32 reference matching AudioAttentionLayers.forward."""
    D = latent_code.shape[-1]
    x = latent_code
    for p in layer_params:
        q = x @ p["wq"].T + p["bq"]
        k = audio_features @ p["wk"].T + p["bk"]
        v = audio_features @ p["wv"].T + p["bv"]
        scores = jnp.einsum("bqd,bkd->bqk", q, k) / jnp.sqrt(jnp.float32(D))
        probs = jax.nn.softmax(scores, axis=-1)
        x = jnp.einsum("bqk,bkd->bqd", probs, v) + x
    return x


if __name__ == "__main__":
    B, S, D = 2, 16, 32      # batch, seq, feature_dim
    NUM_LAYERS = 2

    key = jax.random.PRNGKey(0)
    keys = jax.random.split(key, 2 + 6 * NUM_LAYERS)

    latent_code = jax.random.normal(keys[0], (B, S, D), dtype=jnp.float32)
    audio_features = jax.random.normal(keys[1], (B, S, D), dtype=jnp.float32)

    # Parameter init following nn.Linear(feature_dim, feature_dim)
    bound = 1.0 / math.sqrt(D)
    layer_params = []
    for l in range(NUM_LAYERS):
        kk = keys[2 + 6 * l: 2 + 6 * (l + 1)]
        layer_params.append({
            "wq": jax.random.uniform(kk[0], (D, D), jnp.float32, -bound, bound),
            "bq": jax.random.uniform(kk[1], (D,), jnp.float32, -bound, bound),
            "wk": jax.random.uniform(kk[2], (D, D), jnp.float32, -bound, bound),
            "bk": jax.random.uniform(kk[3], (D,), jnp.float32, -bound, bound),
            "wv": jax.random.uniform(kk[4], (D, D), jnp.float32, -bound, bound),
            "bv": jax.random.uniform(kk[5], (D,), jnp.float32, -bound, bound),
        })

    # One-time weight packing (cache this in real use; off the hot path).
    packed = prepare_params(layer_params, D)

    out = audio_attention_layers(latent_code, audio_features, packed)
    out = jax.block_until_ready(out)

    ref = _reference(latent_code, audio_features, layer_params)
    assert out.shape == (B, S, D)
    # Tolerance covers bf16 MXU operands (f32 accumulation everywhere);
    # softmax division is exact.
    assert jnp.allclose(out, ref, atol=2e-2, rtol=2e-2), "mismatch vs reference"

    print("KERNEL_OK")
</pallas_src>

<mosaic_0001>
module attributes {stable_mosaic.version = 11 : i64} {
  func.func @kernel(%arg0: i32, %arg1: memref<1x16x128xf32, #tpu.memory_space<vmem>>, %arg2: memref<1x16x128xf32, #tpu.memory_space<vmem>>, %arg3: memref<2x128x128xbf16, #tpu.memory_space<vmem>>, %arg4: memref<128x512xbf16, #tpu.memory_space<vmem>>, %arg5: memref<1x16x128xf32, #tpu.memory_space<vmem>>) attributes {dimension_semantics = [#tpu.dimension_semantics<parallel>], iteration_bounds = array<i64: 2>, scalar_prefetch = 0 : i64, scratch_operands = 0 : i64, tpu.core_type = #tpu.core_type<tc>, window_params = [{transform_indices = @transform_0, window_bounds = array<i64: 1, 16, 128>}, {transform_indices = @transform_1, window_bounds = array<i64: 1, 16, 128>}, {pipeline_mode = #tpu.pipeline_mode<synchronous>, transform_indices = @transform_2, window_bounds = array<i64: 2, 128, 128>}, {pipeline_mode = #tpu.pipeline_mode<synchronous>, transform_indices = @transform_3, window_bounds = array<i64: 128, 512>}, {transform_indices = @transform_4, window_bounds = array<i64: 1, 16, 128>}]} {
    %c0 = arith.constant 0 : index
    %c0_0 = arith.constant 0 : index
    %c0_1 = arith.constant 0 : index
    %0 = vector.load %arg2[%c0, %c0_0, %c0_1] : memref<1x16x128xf32, #tpu.memory_space<vmem>>, vector<1x16x128xf32>
    %1 = vector.shape_cast %0 : vector<1x16x128xf32> to vector<16x128xf32>
    %2 = arith.truncf %1 : vector<16x128xf32> to vector<16x128xbf16>
    %c0_2 = arith.constant 0 : index
    %c0_3 = arith.constant 0 : index
    %3 = vector.load %arg4[%c0_2, %c0_3] : memref<128x512xbf16, #tpu.memory_space<vmem>>, vector<128x512xbf16>
    %cst = arith.constant dense<0.000000e+00> : vector<16x512xf32>
    %4 = tpu.matmul %2, %3, %cst {dimension_numbers = #tpu.dot_dimension_numbers<[1], [0], [0], [1], [0, 0, 1, 1], [], []>} : vector<16x128xbf16>, vector<128x512xbf16>, vector<16x512xf32> -> vector<16x512xf32>
    %c0_4 = arith.constant 0 : index
    %c0_5 = arith.constant 0 : index
    %c0_6 = arith.constant 0 : index
    %5 = vector.load %arg1[%c0_4, %c0_5, %c0_6] : memref<1x16x128xf32, #tpu.memory_space<vmem>>, vector<1x16x128xf32>
    %6 = vector.shape_cast %5 : vector<1x16x128xf32> to vector<16x128xf32>
    %7 = arith.truncf %6 : vector<16x128xf32> to vector<16x128xbf16>
    %c0_7 = arith.constant 0 : index
    %c0_8 = arith.constant 0 : index
    %c0_9 = arith.constant 0 : index
    %8 = vector.load %arg3[%c0_7, %c0_8, %c0_9] : memref<2x128x128xbf16, #tpu.memory_space<vmem>>, vector<1x128x128xbf16>
    %9 = vector.shape_cast %8 : vector<1x128x128xbf16> to vector<128x128xbf16>
    %cst_10 = arith.constant dense<0.000000e+00> : vector<16x128xf32>
    %10 = tpu.matmul %7, %9, %cst_10 {dimension_numbers = #tpu.dot_dimension_numbers<[1], [0], [0], [1], [0, 0, 1, 1], [], []>} : vector<16x128xbf16>, vector<128x128xbf16>, vector<16x128xf32> -> vector<16x128xf32>
    %11 = vector.extract_strided_slice %4 {offsets = [0, 0], sizes = [16, 128], strides = [1, 1]} : vector<16x512xf32> to vector<16x128xf32>
    %12 = vector.extract_strided_slice %4 {offsets = [0, 128], sizes = [16, 128], strides = [1, 1]} : vector<16x512xf32> to vector<16x128xf32>
    %13 = arith.truncf %10 : vector<16x128xf32> to vector<16x128xbf16>
    %14 = arith.truncf %11 : vector<16x128xf32> to vector<16x128xbf16>
    "tpu.trace_start"() <{level = 10 : i32, message = "qd,kd->qk"}> : () -> ()
    %cst_11 = arith.constant dense<0.000000e+00> : vector<16x16xf32>
    %15 = tpu.matmul %13, %14, %cst_11 {dimension_numbers = #tpu.dot_dimension_numbers<[1], [1], [0], [0], [0, 0, 1, 0], [], []>} : vector<16x128xbf16>, vector<16x128xbf16>, vector<16x16xf32> -> vector<16x16xf32>
    "tpu.trace_stop"() : () -> ()
    %cst_12 = arith.constant 0.176776692 : f32
    %16 = vector.broadcast %cst_12 : f32 to vector<16x16xf32>
    %17 = arith.mulf %15, %16 : vector<16x16xf32>
    %cst_13 = arith.constant dense<0xFF800000> : vector<16xf32>
    %18 = vector.multi_reduction <maximumf>, %17, %cst_13 [1] : vector<16x16xf32> to vector<16xf32>
    %19 = vector.shape_cast %18 : vector<16xf32> to vector<16x1xf32>
    %20 = vector.broadcast %19 : vector<16x1xf32> to vector<16x16xf32>
    %21 = arith.subf %17, %20 : vector<16x16xf32>
    %22 = math.exp %21 : vector<16x16xf32>
    %cst_14 = arith.constant dense<0.000000e+00> : vector<16xf32>
    %23 = vector.multi_reduction <add>, %22, %cst_14 [1] : vector<16x16xf32> to vector<16xf32>
    %24 = vector.shape_cast %23 : vector<16xf32> to vector<16x1xf32>
    %25 = vector.broadcast %24 : vector<16x1xf32> to vector<16x16xf32>
    %26 = arith.divf %22, %25 : vector<16x16xf32>
    %27 = arith.truncf %26 : vector<16x16xf32> to vector<16x16xbf16>
    %28 = arith.truncf %12 : vector<16x128xf32> to vector<16x128xbf16>
    "tpu.trace_start"() <{level = 10 : i32, message = "qk,kd->qd"}> : () -> ()
    %cst_15 = arith.constant dense<0.000000e+00> : vector<16x128xf32>
    %29 = tpu.matmul %27, %28, %cst_15 {dimension_numbers = #tpu.dot_dimension_numbers<[1], [0], [0], [1], [0, 0, 1, 1], [], []>} : vector<16x16xbf16>, vector<16x128xbf16>, vector<16x128xf32> -> vector<16x128xf32>
    "tpu.trace_stop"() : () -> ()
    %30 = arith.addf %29, %6 : vector<16x128xf32>
    %31 = arith.truncf %30 : vector<16x128xf32> to vector<16x128xbf16>
    %c1 = arith.constant 1 : index
    %c0_16 = arith.constant 0 : index
    %c0_17 = arith.constant 0 : index
    %32 = vector.load %arg3[%c1, %c0_16, %c0_17] : memref<2x128x128xbf16, #tpu.memory_space<vmem>>, vector<1x128x128xbf16>
    %33 = vector.shape_cast %32 : vector<1x128x128xbf16> to vector<128x128xbf16>
    %cst_18 = arith.constant dense<0.000000e+00> : vector<16x128xf32>
    %34 = tpu.matmul %31, %33, %cst_18 {dimension_numbers = #tpu.dot_dimension_numbers<[1], [0], [0], [1], [0, 0, 1, 1], [], []>} : vector<16x128xbf16>, vector<128x128xbf16>, vector<16x128xf32> -> vector<16x128xf32>
    %35 = vector.extract_strided_slice %4 {offsets = [0, 256], sizes = [16, 128], strides = [1, 1]} : vector<16x512xf32> to vector<16x128xf32>
    %36 = vector.extract_strided_slice %4 {offsets = [0, 384], sizes = [16, 128], strides = [1, 1]} : vector<16x512xf32> to vector<16x128xf32>
    %37 = arith.truncf %34 : vector<16x128xf32> to vector<16x128xbf16>
    %38 = arith.truncf %35 : vector<16x128xf32> to vector<16x128xbf16>
    "tpu.trace_start"() <{level = 10 : i32, message = "qd,kd->qk"}> : () -> ()
    %cst_19 = arith.constant dense<0.000000e+00> : vector<16x16xf32>
    %39 = tpu.matmul %37, %38, %cst_19 {dimension_numbers = #tpu.dot_dimension_numbers<[1], [1], [0], [0], [0, 0, 1, 0], [], []>} : vector<16x128xbf16>, vector<16x128xbf16>, vector<16x16xf32> -> vector<16x16xf32>
    "tpu.trace_stop"() : () -> ()
    %cst_20 = arith.constant 0.176776692 : f32
    %40 = vector.broadcast %cst_20 : f32 to vector<16x16xf32>
    %41 = arith.mulf %39, %40 : vector<16x16xf32>
    %cst_21 = arith.constant dense<0xFF800000> : vector<16xf32>
    %42 = vector.multi_reduction <maximumf>, %41, %cst_21 [1] : vector<16x16xf32> to vector<16xf32>
    %43 = vector.shape_cast %42 : vector<16xf32> to vector<16x1xf32>
    %44 = vector.broadcast %43 : vector<16x1xf32> to vector<16x16xf32>
    %45 = arith.subf %41, %44 : vector<16x16xf32>
    %46 = math.exp %45 : vector<16x16xf32>
    %cst_22 = arith.constant dense<0.000000e+00> : vector<16xf32>
    %47 = vector.multi_reduction <add>, %46, %cst_22 [1] : vector<16x16xf32> to vector<16xf32>
    %48 = vector.shape_cast %47 : vector<16xf32> to vector<16x1xf32>
    %49 = vector.broadcast %48 : vector<16x1xf32> to vector<16x16xf32>
    %50 = arith.divf %46, %49 : vector<16x16xf32>
    %51 = arith.truncf %50 : vector<16x16xf32> to vector<16x16xbf16>
    %52 = arith.truncf %36 : vector<16x128xf32> to vector<16x128xbf16>
    "tpu.trace_start"() <{level = 10 : i32, message = "qk,kd->qd"}> : () -> ()
    %cst_23 = arith.constant dense<0.000000e+00> : vector<16x128xf32>
    %53 = tpu.matmul %51, %52, %cst_23 {dimension_numbers = #tpu.dot_dimension_numbers<[1], [0], [0], [1], [0, 0, 1, 1], [], []>} : vector<16x16xbf16>, vector<16x128xbf16>, vector<16x128xf32> -> vector<16x128xf32>
    "tpu.trace_stop"() : () -> ()
    %54 = arith.addf %53, %30 : vector<16x128xf32>
    %c0_24 = arith.constant 0 : index
    %c0_25 = arith.constant 0 : index
    %c0_26 = arith.constant 0 : index
    %55 = vector.load %arg5[%c0_24, %c0_25, %c0_26] : memref<1x16x128xf32, #tpu.memory_space<vmem>>, vector<1x16x128xf32>
    %56 = vector.shape_cast %55 : vector<1x16x128xf32> to vector<16x128xf32>
    %57 = vector.shape_cast %54 : vector<16x128xf32> to vector<1x16x128xf32>
    tpu.vector_store %arg5[%c0_24, %c0_25, %c0_26], %57 {strides = array<i32>} : memref<1x16x128xf32, #tpu.memory_space<vmem>>, vector<1x16x128xf32>,
    return
  }
  func.func @transform_0(%arg0: i32) -> (i32, i32, i32) {
    %c0_i32 = arith.constant 0 : i32
    %c0_i32_0 = arith.constant 0 : i32
    %c0_i32_1 = arith.constant 0 : i32
    return %arg0, %c0_i32, %c0_i32_0 : i32, i32, i32
  }
  func.func @transform_1(%arg0: i32) -> (i32, i32, i32) {
    %c0_i32 = arith.constant 0 : i32
    %c0_i32_0 = arith.constant 0 : i32
    %c0_i32_1 = arith.constant 0 : i32
    return %arg0, %c0_i32, %c0_i32_0 : i32, i32, i32
  }
  func.func @transform_2(%arg0: i32) -> (i32, i32, i32) {
    %c0_i32 = arith.constant 0 : i32
    %c0_i32_0 = arith.constant 0 : i32
    %c0_i32_1 = arith.constant 0 : i32
    %c0_i32_2 = arith.constant 0 : i32
    return %c0_i32, %c0_i32_0, %c0_i32_1 : i32, i32, i32
  }
  func.func @transform_3(%arg0: i32) -> (i32, i32) {
    %c0_i32 = arith.constant 0 : i32
    %c0_i32_0 = arith.constant 0 : i32
    %c0_i32_1 = arith.constant 0 : i32
    return %c0_i32, %c0_i32_0 : i32, i32
  }
  func.func @transform_4(%arg0: i32) -> (i32, i32, i32) {
    %c0_i32 = arith.constant 0 : i32
    %c0_i32_0 = arith.constant 0 : i32
    %c0_i32_1 = arith.constant 0 : i32
    return %arg0, %c0_i32, %c0_i32_0 : i32, i32, i32
  }
}

</mosaic_0001>

<llo_original>
// kernel: tpu_custom_call.1
$region0: #{tpu_custom_call.1}
  #allocation0 [shape = 'u32[]', space=smem, size = 0x4, offset = 0x4, fixed_abs, tag = 'smem constant byte address 0x4 - core index']
  #allocation1 [shape = 'u32[144,128]{1,0:T(1,128)}', space=vmem, size = 0x12000, scoped, tag = 'internal scratch']
  %s0 = inlined_call_operand.hbm [shape: f32[2,16,128], index: 0, kind: input, shape index: {}]
  %s1 = inlined_call_operand.hbm [shape: f32[2,16,128], index: 1, kind: input, shape index: {}]
  %s2 = inlined_call_operand.hbm [shape: bf16[2,128,128], index: 2, kind: input, shape index: {}]
  %s3 = inlined_call_operand.hbm [shape: bf16[128,512], index: 3, kind: input, shape index: {}]
  %s4 = inlined_call_operand.hbm [shape: f32[2,16,128], index: 4, kind: output, shape index: {}]
  %s5 = sld [smem:[#allocation0]]
  $region65: #{tpu_custom_call.1} parent=0
    _
  %s7 = ssub.s32 1, %s5
  %s8 = scalar_select 0, %s7, %s5
  $region1: #{tpu_custom_call.1} parent=0
    #allocation2 [shape = 'u8[16384]{0}', space=vmem, size = 0x4000, scoped, tag = 'input window, operand 0']
    #allocation3 [shape = 's32[2]{0}', space=sflag, size = 0x8, scoped, tag = 'scoped memory for tpu_custom_call.1']
    #allocation4 [shape = 's32[2]{0}', space=sflag, size = 0x8, scoped, tag = 'scoped memory for tpu_custom_call.1']
    #allocation5 [shape = 'u8[16384]{0}', space=vmem, size = 0x4000, scoped, tag = 'input window, operand 1']
    #allocation6 [shape = 's32[2]{0}', space=sflag, size = 0x8, scoped, tag = 'scoped memory for tpu_custom_call.1']
    #allocation7 [shape = 'u8[65536]{0}', space=vmem, size = 0x10000, scoped, tag = 'input window, operand 2, single buffered']
    #allocation8 [shape = 'u8[131072]{0}', space=vmem, size = 0x20000, scoped, tag = 'input window, operand 3, single buffered']
    #allocation9 [shape = 's32[1]{0}', space=sflag, size = 0x4, scoped, tag = 'scoped memory for tpu_custom_call.1']
    #allocation10 [shape = 'u8[16384]{0}', space=vmem, size = 0x4000, scoped, tag = 'output window, operand 0']
    %9 = vsyncpa [#allocation3], 0
    %s10 = scalar_lea.sflag [#allocation3], 1
    %11 = vsyncpa %s10, 0
    %12 = vsyncpa [#allocation6], 0
    %s13 = scalar_lea.sflag [#allocation6], 1
    %14 = vsyncpa %s13, 0
    %15 = vsyncpa [#allocation9], 0
    %16 = vsyncpa [#allocation4], 0
    %s17 = scalar_lea.sflag [#allocation4], 1
    %18 = vsyncpa %s17, 0
    loop: start=0, step=1, limit=4
    $region2: #{tpu_custom_call.1} parent=1 // loop_pre_header
      _
    $region3: #{tpu_custom_call.1} parent=1 // loop_header
      %s20 = sphi 0, %s24
      %p21 = scmp.ge.s32.totalorder %s20, 4
      %s30 = sphi 0, %s32
      %s33 = sphi 0, %s30
      %s34 = sphi 0, %s33
      %s50 = sphi 0, %s34
      %s56 = sphi 0, %s58
      %s59 = sphi 0, %s56
      %s60 = sphi 0, %s59
      %s76 = sphi 0, %s60
      %s80 = sphi 0, %s80
      %s82 = sphi 0, %s80
      %s83 = sphi 0, %s82
      %s97 = sphi 0, %s83
      %s101 = sphi 0, %s101
      %s103 = sphi 0, %s101
      %s104 = sphi 0, %s103
      %s118 = sphi 0, %s104
      %s124 = sphi 0, %s126
      %s127 = sphi 0, %s124
      %s128 = sphi 0, %s127
      %s144 = sphi 0, %s128
    $region4: #{tpu_custom_call.1} parent=1 // loop_header_branch
      %23 = sbr.rel (%p21) target = $region8
    $region5: #{tpu_custom_call.1} parent=1 // loop_body
      %s25 = ssub.s32 %s20, 1
      %s26 = ssub.s32 %s20, 2
      %s27 = sadd.s32 %s20, 1
      %s28 = ssub.s32 %s20, %s27
      %p29 = scmp.eq.s32.totalorder %s28, 0
      %s31 = sadd.s32 %s30, 1
      %s32 = scalar_select %p29, %s30, %s31
      %p35 = pneg %p29
      %p36 = scmp.eq.s32.totalorder %s20, 1
      %p37 = por %p35, %p36
      %p38 = scmp.ne.s32.totalorder %s30, %s33
      %p39 = scmp.eq.s32.totalorder %s20, 0
      %p40 = por %p38, %p39
      %p41 = scmp.ne.s32.totalorder %s30, %s33
      %p42 = scmp.eq.s32.totalorder %s25, 1
      %p43 = por %p41, %p42
      %p44 = scmp.ne.s32.totalorder %s33, %s34
      %p45 = scmp.eq.s32.totalorder %s25, 0
      %p46 = por %p44, %p45
      %p47 = scmp.ne.s32.totalorder %s33, %s34
      %p48 = scmp.eq.s32.totalorder %s26, 1
      %p49 = por %p47, %p48
      %p51 = scmp.ne.s32.totalorder %s34, %s50
      %p52 = scmp.eq.s32.totalorder %s26, 0
      %p53 = por %p51, %p52
      %s54 = ssub.s32 %s20, %s27
      %p55 = scmp.eq.s32.totalorder %s54, 0
      %s57 = sadd.s32 %s56, 1
      %s58 = scalar_select %p55, %s56, %s57
      %p61 = pneg %p55
      %p62 = scmp.eq.s32.totalorder %s20, 1
      %p63 = por %p61, %p62
      %p64 = scmp.ne.s32.totalorder %s56, %s59
      %p65 = scmp.eq.s32.totalorder %s20, 0
      %p66 = por %p64, %p65
      %p67 = scmp.ne.s32.totalorder %s56, %s59
      %p68 = scmp.eq.s32.totalorder %s25, 1
      %p69 = por %p67, %p68
      %p70 = scmp.ne.s32.totalorder %s59, %s60
      %p71 = scmp.eq.s32.totalorder %s25, 0
      %p72 = por %p70, %p71
      %p73 = scmp.ne.s32.totalorder %s59, %s60
      %p74 = scmp.eq.s32.totalorder %s26, 1
      %p75 = por %p73, %p74
      %p77 = scmp.ne.s32.totalorder %s60, %s76
      %p78 = scmp.eq.s32.totalorder %s26, 0
      %p79 = por %p77, %p78
      %s81 = sadd.s32 %s80, 1
      %p84 = scmp.eq.s32.totalorder %s20, 1
      %p85 = scmp.ne.s32.totalorder %s80, %s82
      %p86 = scmp.eq.s32.totalorder %s20, 0
      %p87 = por %p85, %p86
      %p88 = scmp.ne.s32.totalorder %s80, %s82
      %p89 = scmp.eq.s32.totalorder %s25, 1
      %p90 = por %p88, %p89
      %p91 = scmp.ne.s32.totalorder %s82, %s83
      %p92 = scmp.eq.s32.totalorder %s25, 0
      %p93 = por %p91, %p92
      %p94 = scmp.ne.s32.totalorder %s82, %s83
      %p95 = scmp.eq.s32.totalorder %s26, 1
      %p96 = por %p94, %p95
      %p98 = scmp.ne.s32.totalorder %s83, %s97
      %p99 = scmp.eq.s32.totalorder %s26, 0
      %p100 = por %p98, %p99
      %s102 = sadd.s32 %s101, 1
      %p105 = scmp.eq.s32.totalorder %s20, 1
      %p106 = scmp.ne.s32.totalorder %s101, %s103
      %p107 = scmp.eq.s32.totalorder %s20, 0
      %p108 = por %p106, %p107
      %p109 = scmp.ne.s32.totalorder %s101, %s103
      %p110 = scmp.eq.s32.totalorder %s25, 1
      %p111 = por %p109, %p110
      %p112 = scmp.ne.s32.totalorder %s103, %s104
      %p113 = scmp.eq.s32.totalorder %s25, 0
      %p114 = por %p112, %p113
      %p115 = scmp.ne.s32.totalorder %s103, %s104
      %p116 = scmp.eq.s32.totalorder %s26, 1
      %p117 = por %p115, %p116
      %p119 = scmp.ne.s32.totalorder %s104, %s118
      %p120 = scmp.eq.s32.totalorder %s26, 0
      %p121 = por %p119, %p120
      %s122 = ssub.s32 %s20, %s27
      %p123 = scmp.eq.s32.totalorder %s122, 0
      %s125 = sadd.s32 %s124, 1
      %s126 = scalar_select %p123, %s124, %s125
      %p129 = pneg %p123
      %p130 = scmp.eq.s32.totalorder %s20, 1
      %p131 = por %p129, %p130
      %p132 = scmp.ne.s32.totalorder %s124, %s127
      %p133 = scmp.eq.s32.totalorder %s20, 0
      %p134 = por %p132, %p133
      %p135 = scmp.ne.s32.totalorder %s124, %s127
      %p136 = scmp.eq.s32.totalorder %s25, 1
      %p137 = por %p135, %p136
      %p138 = scmp.ne.s32.totalorder %s127, %s128
      %p139 = scmp.eq.s32.totalorder %s25, 0
      %p140 = por %p138, %p139
      %p141 = scmp.ne.s32.totalorder %s127, %s128
      %p142 = scmp.eq.s32.totalorder %s26, 1
      %p143 = por %p141, %p142
      %p145 = scmp.ne.s32.totalorder %s128, %s144
      %p146 = scmp.eq.s32.totalorder %s26, 0
      %p147 = por %p145, %p146
      %p148 = scmp.le.s32.totalorder 1, %s20
      %p149 = scmp.lt.s32.totalorder %s20, 3
      %p150 = pnand %p148, %p149
      %p151 = pneg %p150
      // Predicated region
      $region9: #{tpu_custom_call.1} parent=5 // pred_check
        _
      $region10: #{tpu_custom_call.1} parent=5 // pred_check_branch
        %153 = sbr.rel (%p150) target = $region12
      $region11: #{tpu_custom_call.1} parent=5 // pred_region
        %s154 = ssub.s32 %s20, 1
        // Predicated region
        $region13: #{tpu_custom_call.1} parent=11 // pred_check
          %p155 = pneg %p93
        $region14: #{tpu_custom_call.1} parent=11 // pred_check_branch
          %157 = sbr.rel (%p155) target = $region16
        $region15: #{tpu_custom_call.1} parent=11 // pred_region
          %s159 = ssub.s32 2048, 2048
          %160 = vsyncadd [#allocation6], %s159
          %s161 = sshll.u32 [#allocation7], 4
          %s162 = int_to_ptr.vmem [resolvable:$true] %s161
          %167 = dma.hbm_to_vmem [thread:$0]  %s2, 2048, %s162, [#allocation6], 64, 64, 4
        $region16: #{tpu_custom_call.1} parent=11 // pred_fallthru
          _
        // Predicated region
        $region17: #{tpu_custom_call.1} parent=11 // pred_check
          %p168 = pneg %p114
        $region18: #{tpu_custom_call.1} parent=11 // pred_check_branch
          %170 = sbr.rel (%p168) target = $region20
        $region19: #{tpu_custom_call.1} parent=11 // pred_region
          %s172 = ssub.s32 4096, 4096
          %173 = vsyncadd [#allocation9], %s172
          %s174 = sshll.u32 [#allocation8], 4
          %s175 = int_to_ptr.vmem [resolvable:$true] %s174
          %180 = dma.hbm_to_vmem [thread:$0]  %s3, 4096, %s175, [#allocation9], 256, 256, 16
        $region20: #{tpu_custom_call.1} parent=11 // pred_fallthru
          _
      $region12: #{tpu_custom_call.1} parent=5 // pred_fallthru
        _
      %p181 = scmp.lt.s32.totalorder %s20, 2
      // Predicated region
      $region21: #{tpu_custom_call.1} parent=5 // pred_check
        %p182 = pneg %p181
      $region22: #{tpu_custom_call.1} parent=5 // pred_check_branch
        %184 = sbr.rel (%p182) target = $region24
      $region23: #{tpu_custom_call.1} parent=5 // pred_region
        // Predicated region
        $region25: #{tpu_custom_call.1} parent=23 // pred_check
          %p185 = pneg %p40
        $region26: #{tpu_custom_call.1} parent=23 // pred_check_branch
          %187 = sbr.rel (%p185) target = $region28
        $region27: #{tpu_custom_call.1} parent=23 // pred_region
          %s188 = sand.u32 %s30, 1
          %s189 = scalar_lea.sflag [#allocation3], %s188
          %s190 = sand.u32 %s30, 1
          %s191 = smul.addr %s190, 16
          %s192 = scalar_lea.vmem [#allocation2], %s191
          %s194 = ssub.s32 256, 256
          %195 = vsyncadd %s189, %s194
          %s196 = smul.addr %s20, 2
          %s197 = smul.addr %s196, 128
          %s198 = scalar_lea.hbm %s0, %s197
          %s199 = sshll.u32 %s192, 4
          %s200 = int_to_ptr.vmem [resolvable:$true] %s199
          %205 = dma.hbm_to_vmem [thread:$0]  %s198, 256, %s200, %s189, 128, 128, 8
        $region28: #{tpu_custom_call.1} parent=23 // pred_fallthru
          _
        // Predicated region
        $region29: #{tpu_custom_call.1} parent=23 // pred_check
          %p206 = pneg %p66
        $region30: #{tpu_custom_call.1} parent=23 // pred_check_branch
          %208 = sbr.rel (%p206) target = $region32
        $region31: #{tpu_custom_call.1} parent=23 // pred_region
          %s209 = sand.u32 %s20, 1
          %s210 = scalar_lea.sflag [#allocation6], %s209
          %s211 = sand.u32 %s56, 1
          %s212 = smul.addr %s211, 16
          %s213 = scalar_lea.vmem [#allocation5], %s212
          %s215 = ssub.s32 256, 256
          %216 = vsyncadd %s210, %s215
          %s217 = smul.addr %s20, 2
          %s218 = smul.addr %s217, 128
          %s219 = scalar_lea.hbm %s1, %s218
          %s220 = sshll.u32 %s213, 4
          %s221 = int_to_ptr.vmem [resolvable:$true] %s220
          %226 = dma.hbm_to_vmem [thread:$0]  %s219, 256, %s221, %s210, 128, 128, 8
        $region32: #{tpu_custom_call.1} parent=23 // pred_fallthru
          _
      $region24: #{tpu_custom_call.1} parent=5 // pred_fallthru
        _
      %p227 = scmp.le.s32.totalorder 1, %s20
      %p228 = scmp.lt.s32.totalorder %s20, 3
      %p229 = pnand %p227, %p228
      %p230 = pneg %p229
      // Predicated region
      $region33: #{tpu_custom_call.1} parent=5 // pred_check
        _
      $region34: #{tpu_custom_call.1} parent=5 // pred_check_branch
        %232 = sbr.rel (%p229) target = $region36
      $region35: #{tpu_custom_call.1} parent=5 // pred_region
        %s233 = ssub.s32 %s20, 1
        %s234 = sand.u32 %s33, 1
        %s235 = scalar_lea.sflag [#allocation3], %s234
        %s236 = sand.u32 %s33, 1
        %s237 = smul.addr %s236, 16
        %s238 = scalar_lea.vmem [#allocation2], %s237
        // Predicated region
        $region37: #{tpu_custom_call.1} parent=35 // pred_check
          %p239 = pneg %p46
        $region38: #{tpu_custom_call.1} parent=35 // pred_check_branch
          %241 = sbr.rel (%p239) target = $region40
        $region39: #{tpu_custom_call.1} parent=35 // pred_region
          %242 = dma.done %s235, 256
        $region40: #{tpu_custom_call.1} parent=35 // pred_fallthru
          _
        %s243 = sand.u32 %s25, 1
        %s244 = scalar_lea.sflag [#allocation6], %s243
        %s245 = sand.u32 %s59, 1
        %s246 = smul.addr %s245, 16
        %s247 = scalar_lea.vmem [#allocation5], %s246
        // Predicated region
        $region41: #{tpu_custom_call.1} parent=35 // pred_check
          %p248 = pneg %p72
        $region42: #{tpu_custom_call.1} parent=35 // pred_check_branch
          %250 = sbr.rel (%p248) target = $region44
        $region43: #{tpu_custom_call.1} parent=35 // pred_region
          %251 = dma.done %s244, 256
        $region44: #{tpu_custom_call.1} parent=35 // pred_fallthru
          _
        // Predicated region
        $region45: #{tpu_custom_call.1} parent=35 // pred_check
          %p252 = pneg %p93
        $region46: #{tpu_custom_call.1} parent=35 // pred_check_branch
          %254 = sbr.rel (%p252) target = $region48
        $region47: #{tpu_custom_call.1} parent=35 // pred_region
          %255 = dma.done [#allocation6], 2048
        $region48: #{tpu_custom_call.1} parent=35 // pred_fallthru
          _
        // Predicated region
        $region49: #{tpu_custom_call.1} parent=35 // pred_check
          %p256 = pneg %p114
        $region50: #{tpu_custom_call.1} parent=35 // pred_check_branch
          %258 = sbr.rel (%p256) target = $region52
        $region51: #{tpu_custom_call.1} parent=35 // pred_region
          %259 = dma.done [#allocation9], 4096
        $region52: #{tpu_custom_call.1} parent=35 // pred_fallthru
          _
        %s260 = sand.u32 %s33, 1
        %s261 = scalar_lea.sflag [#allocation3], %s260
        %s262 = sand.u32 %s33, 1
        %s263 = smul.addr %s262, 16
        %s264 = scalar_lea.vmem [#allocation2], %s263
        %p265 = pneg %p46
        %p266 = pneg %p43
        %s267 = sand.u32 %s25, 1
        %s268 = scalar_lea.sflag [#allocation6], %s267
        %s269 = sand.u32 %s59, 1
        %s270 = smul.addr %s269, 16
        %s271 = scalar_lea.vmem [#allocation5], %s270
        %p272 = pneg %p72
        %p273 = pneg %p69
        %p274 = pneg %p93
        %p275 = pneg %p90
        %p276 = pneg %p114
        %p277 = pneg %p111
        %p278 = pneg %p140
        %p279 = pneg %p137
        %s280 = sand.u32 %s127, 1
        %s281 = scalar_lea.sflag [#allocation4], %s280
        %s282 = sand.u32 %s127, 1
        %s283 = smul.addr %s282, 16
        %s284 = scalar_lea.vmem [#allocation10], %s283
        %v286 = vld [vmem:[%s247] sm:$0xff]
        %v287 = vld [vmem:[%s247 + $0x8] sm:$0xff]
        %v288 = vpack.c.bf16 %v287, %v286
        %v289 = vld [vmem:[#allocation8] sm:$0xff]
        %v290 = vld [vmem:[#allocation8 + $0x8] sm:$0xff]
        %v291 = vld [vmem:[#allocation8 + $0x10] sm:$0xff]
        %v292 = vld [vmem:[#allocation8 + $0x18] sm:$0xff]
        %v293 = vld [vmem:[#allocation8 + $0x20] sm:$0xff]
        %v294 = vld [vmem:[#allocation8 + $0x28] sm:$0xff]
        %v295 = vld [vmem:[#allocation8 + $0x30] sm:$0xff]
        %v296 = vld [vmem:[#allocation8 + $0x38] sm:$0xff]
        %v297 = vld [vmem:[#allocation8 + $0x40] sm:$0xff]
        %v298 = vld [vmem:[#allocation8 + $0x48] sm:$0xff]
        %v299 = vld [vmem:[#allocation8 + $0x50] sm:$0xff]
        %v300 = vld [vmem:[#allocation8 + $0x58] sm:$0xff]
        %v301 = vld [vmem:[#allocation8 + $0x60] sm:$0xff]
        %v302 = vld [vmem:[#allocation8 + $0x68] sm:$0xff]
        %v303 = vld [vmem:[#allocation8 + $0x70] sm:$0xff]
        %v304 = vld [vmem:[#allocation8 + $0x78] sm:$0xff]
        %v305 = vld [vmem:[#allocation8 + $0x80] sm:$0xff]
        %v306 = vld [vmem:[#allocation8 + $0x88] sm:$0xff]
        %v307 = vld [vmem:[#allocation8 + $0x90] sm:$0xff]
        %v308 = vld [vmem:[#allocation8 + $0x98] sm:$0xff]
        %v309 = vld [vmem:[#allocation8 + $0xa0] sm:$0xff]
        %v310 = vld [vmem:[#allocation8 + $0xa8] sm:$0xff]
        %v311 = vld [vmem:[#allocation8 + $0xb0] sm:$0xff]
        %v312 = vld [vmem:[#allocation8 + $0xb8] sm:$0xff]
        %v313 = vld [vmem:[#allocation8 + $0xc0] sm:$0xff]
        %v314 = vld [vmem:[#allocation8 + $0xc8] sm:$0xff]
        %v315 = vld [vmem:[#allocation8 + $0xd0] sm:$0xff]
        %v316 = vld [vmem:[#allocation8 + $0xd8] sm:$0xff]
        %v317 = vld [vmem:[#allocation8 + $0xe0] sm:$0xff]
        %v318 = vld [vmem:[#allocation8 + $0xe8] sm:$0xff]
        %v319 = vld [vmem:[#allocation8 + $0xf0] sm:$0xff]
        %v320 = vld [vmem:[#allocation8 + $0xf8] sm:$0xff]
        %v353 = vunpack.c.l.b16 %v289
        %v354 = vunpack.c.h.b16 %v289
        %v355 = vunpack.c.l.b16 %v290
        %v356 = vunpack.c.h.b16 %v290
        %v357 = vunpack.c.l.b16 %v291
        %v358 = vunpack.c.h.b16 %v291
        %v359 = vunpack.c.l.b16 %v292
        %v360 = vunpack.c.h.b16 %v292
        %v361 = vunpack.c.l.b16 %v293
        %v362 = vunpack.c.h.b16 %v293
        %v363 = vunpack.c.l.b16 %v294
        %v364 = vunpack.c.h.b16 %v294
        %v365 = vunpack.c.l.b16 %v295
        %v366 = vunpack.c.h.b16 %v295
        %v367 = vunpack.c.l.b16 %v296
        %v368 = vunpack.c.h.b16 %v296
        %v369 = vunpack.c.l.b16 %v297
        %v370 = vunpack.c.h.b16 %v297
        %v371 = vunpack.c.l.b16 %v298
        %v372 = vunpack.c.h.b16 %v298
        %v373 = vunpack.c.l.b16 %v299
        %v374 = vunpack.c.h.b16 %v299
        %v375 = vunpack.c.l.b16 %v300
        %v376 = vunpack.c.h.b16 %v300
        %v377 = vunpack.c.l.b16 %v301
        %v378 = vunpack.c.h.b16 %v301
        %v379 = vunpack.c.l.b16 %v302
        %v380 = vunpack.c.h.b16 %v302
        %v381 = vunpack.c.l.b16 %v303
        %v382 = vunpack.c.h.b16 %v303
        %v383 = vunpack.c.l.b16 %v304
        %v384 = vunpack.c.h.b16 %v304
        %v385 = vunpack.c.l.b16 %v305
        %v386 = vunpack.c.h.b16 %v305
        %v387 = vunpack.c.l.b16 %v306
        %v388 = vunpack.c.h.b16 %v306
        %v389 = vunpack.c.l.b16 %v307
        %v390 = vunpack.c.h.b16 %v307
        %v391 = vunpack.c.l.b16 %v308
        %v392 = vunpack.c.h.b16 %v308
        %v393 = vunpack.c.l.b16 %v309
        %v394 = vunpack.c.h.b16 %v309
        %v395 = vunpack.c.l.b16 %v310
        %v396 = vunpack.c.h.b16 %v310
        %v397 = vunpack.c.l.b16 %v311
        %v398 = vunpack.c.h.b16 %v311
        %v399 = vunpack.c.l.b16 %v312
        %v400 = vunpack.c.h.b16 %v312
        %v401 = vunpack.c.l.b16 %v313
        %v402 = vunpack.c.h.b16 %v313
        %v403 = vunpack.c.l.b16 %v314
        %v404 = vunpack.c.h.b16 %v314
        %v405 = vunpack.c.l.b16 %v315
        %v406 = vunpack.c.h.b16 %v315
        %v407 = vunpack.c.l.b16 %v316
        %v408 = vunpack.c.h.b16 %v316
        %v409 = vunpack.c.l.b16 %v317
        %v410 = vunpack.c.h.b16 %v317
        %v411 = vunpack.c.l.b16 %v318
        %v412 = vunpack.c.h.b16 %v318
        %v413 = vunpack.c.l.b16 %v319
        %v414 = vunpack.c.h.b16 %v319
        %v415 = vunpack.c.l.b16 %v320
        %v416 = vunpack.c.h.b16 %v320
        %v417 = vpack.c.b16 %v357, %v353
        %v418 = vpack.c.b16 %v358, %v354
        %v419 = vpack.c.b16 %v359, %v355
        %v420 = vpack.c.b16 %v360, %v356
        %v421 = vpack.c.b16 %v365, %v361
        %v422 = vpack.c.b16 %v366, %v362
        %v423 = vpack.c.b16 %v367, %v363
        %v424 = vpack.c.b16 %v368, %v364
        %v425 = vpack.c.b16 %v373, %v369
        %v426 = vpack.c.b16 %v374, %v370
        %v427 = vpack.c.b16 %v375, %v371
        %v428 = vpack.c.b16 %v376, %v372
        %v429 = vpack.c.b16 %v381, %v377
        %v430 = vpack.c.b16 %v382, %v378
        %v431 = vpack.c.b16 %v383, %v379
        %v432 = vpack.c.b16 %v384, %v380
        %v433 = vpack.c.b16 %v389, %v385
        %v434 = vpack.c.b16 %v390, %v386
        %v435 = vpack.c.b16 %v391, %v387
        %v436 = vpack.c.b16 %v392, %v388
        %v437 = vpack.c.b16 %v397, %v393
        %v438 = vpack.c.b16 %v398, %v394
        %v439 = vpack.c.b16 %v399, %v395
        %v440 = vpack.c.b16 %v400, %v396
        %v441 = vpack.c.b16 %v405, %v401
        %v442 = vpack.c.b16 %v406, %v402
        %v443 = vpack.c.b16 %v407, %v403
        %v444 = vpack.c.b16 %v408, %v404
        %v445 = vpack.c.b16 %v413, %v409
        %v446 = vpack.c.b16 %v414, %v410
        %v447 = vpack.c.b16 %v415, %v411
        %v448 = vpack.c.b16 %v416, %v412
        %481 = vmatprep.subr.bf16.mxu0 %v446
        %482 = vmatpush1.bf16.msra.mxu0 %v445
        %483 = vmatprep.subr.bf16.mxu0 %v442
        %484 = vmatpush1.bf16.msra.mxu0 %v441
        %485 = vmatprep.subr.bf16.mxu0 %v438
        %486 = vmatpush1.bf16.msra.mxu0 %v437
        %487 = vmatprep.subr.bf16.mxu0 %v434
        %488 = vmatpush1.bf16.msra.mxu0 %v433
        %489 = vmatprep.subr.bf16.mxu0 %v430
        %490 = vmatpush1.bf16.msra.mxu0 %v429
        %491 = vmatprep.subr.bf16.mxu0 %v426
        %492 = vmatpush1.bf16.msra.mxu0 %v425
        %493 = vmatprep.subr.bf16.mxu0 %v422
        %494 = vmatpush1.bf16.msra.mxu0 %v421
        %495 = vmatprep.subr.bf16.mxu0 %v418
        %496 = vmatpush1.bf16.msra.mxu0 %v417
        %497 = vmatprep.subr.bf16.mxu0 0
        %498 = vmatpush2.bf16.msra.mxu0 0
        %499 = vmatprep.subr.bf16.mxu0 0
        %500 = vmatpush2.bf16.msra.mxu0 0
        %501 = vmatprep.subr.bf16.mxu0 0
        %502 = vmatpush2.bf16.msra.mxu0 0
        %503 = vmatprep.subr.bf16.mxu0 0
        %504 = vmatpush2.bf16.msra.mxu0 0
        %505 = vmatprep.subr.bf16.mxu0 0
        %506 = vmatpush2.bf16.msra.mxu0 0
        %507 = vmatprep.subr.bf16.mxu0 0
        %508 = vmatpush2.bf16.msra.mxu0 0
        %509 = vmatprep.subr.bf16.mxu0 0
        %510 = vmatpush2.bf16.msra.mxu0 0
        %511 = vmatprep.subr.bf16.mxu0 0
        %512 = vmatpush2.bf16.msra.mxu0 0
        %513 = vmatprep.mubr.bf16.mxu0 0
        %514 = vmatmul.mubr.bf16.gmra.mxu0 %v288
        %v515 = vpop.f32.mrf.mxu0
        %v516 = vadd.f32 0.0, %v515
        %v517 = vpop.f32.mrf.mxu0
        %v518 = vadd.f32 0.0, %v517
        %v519 = vpop.f32.mrf.mxu0
        %v520 = vadd.f32 0.0, %v519
        %v521 = vpop.f32.mrf.mxu0
        %v522 = vadd.f32 0.0, %v521
        %523 = vdwg.mxu0
        %524 = vmatprep.subr.bf16.mxu0 %v448
        %525 = vmatpush1.bf16.msra.mxu0 %v447
        %526 = vmatprep.subr.bf16.mxu0 %v444
        %527 = vmatpush1.bf16.msra.mxu0 %v443
        %528 = vmatprep.subr.bf16.mxu0 %v440
        %529 = vmatpush1.bf16.msra.mxu0 %v439
        %530 = vmatprep.subr.bf16.mxu0 %v436
        %531 = vmatpush1.bf16.msra.mxu0 %v435
        %532 = vmatprep.subr.bf16.mxu0 %v432
        %533 = vmatpush1.bf16.msra.mxu0 %v431
        %534 = vmatprep.subr.bf16.mxu0 %v428
        %535 = vmatpush1.bf16.msra.mxu0 %v427
        %536 = vmatprep.subr.bf16.mxu0 %v424
        %537 = vmatpush1.bf16.msra.mxu0 %v423
        %538 = vmatprep.subr.bf16.mxu0 %v420
        %539 = vmatpush1.bf16.msra.mxu0 %v419
        %540 = vmatprep.subr.bf16.mxu0 0
        %541 = vmatpush2.bf16.msra.mxu0 0
        %542 = vmatprep.subr.bf16.mxu0 0
        %543 = vmatpush2.bf16.msra.mxu0 0
        %544 = vmatprep.subr.bf16.mxu0 0
        %545 = vmatpush2.bf16.msra.mxu0 0
        %546 = vmatprep.subr.bf16.mxu0 0
        %547 = vmatpush2.bf16.msra.mxu0 0
        %548 = vmatprep.subr.bf16.mxu0 0
        %549 = vmatpush2.bf16.msra.mxu0 0
        %550 = vmatprep.subr.bf16.mxu0 0
        %551 = vmatpush2.bf16.msra.mxu0 0
        %552 = vmatprep.subr.bf16.mxu0 0
        %553 = vmatpush2.bf16.msra.mxu0 0
        %554 = vmatprep.subr.bf16.mxu0 0
        %555 = vmatpush2.bf16.msra.mxu0 0
        %556 = vmatprep.mubr.bf16.mxu0 0
        %557 = vmatmul.mubr.bf16.gmra.mxu0 %v288
        %v558 = vpop.f32.mrf.mxu0
        %v559 = vadd.f32 0.0, %v558
        %v560 = vpop.f32.mrf.mxu0
        %v561 = vadd.f32 0.0, %v560
        %v562 = vpop.f32.mrf.mxu0
        %v563 = vadd.f32 0.0, %v562
        %v564 = vpop.f32.mrf.mxu0
        %v565 = vadd.f32 0.0, %v564
        %566 = vdwg.mxu0
        %v567 = vld [vmem:[%s238] sm:$0xff]
        %v568 = vld [vmem:[%s238 + $0x8] sm:$0xff]
        %v569 = vpack.c.bf16 %v568, %v567
        %v570 = vld [vmem:[#allocation7] sm:$0xf]
        %v571 = vld [vmem:[#allocation7 + $0x4] sm:$0xf]
        %v572 = vld [vmem:[#allocation7 + $0x8] sm:$0xf]
        %v573 = vld [vmem:[#allocation7 + $0xc] sm:$0xf]
        %v574 = vld [vmem:[#allocation7 + $0x10] sm:$0xf]
        %v575 = vld [vmem:[#allocation7 + $0x14] sm:$0xf]
        %v576 = vld [vmem:[#allocation7 + $0x18] sm:$0xf]
        %v577 = vld [vmem:[#allocation7 + $0x1c] sm:$0xf]
        %v578 = vld [vmem:[#allocation7 + $0x20] sm:$0xf]
        %v579 = vld [vmem:[#allocation7 + $0x24] sm:$0xf]
        %v580 = vld [vmem:[#allocation7 + $0x28] sm:$0xf]
        %v581 = vld [vmem:[#allocation7 + $0x2c] sm:$0xf]
        %v582 = vld [vmem:[#allocation7 + $0x30] sm:$0xf]
        %v583 = vld [vmem:[#allocation7 + $0x34] sm:$0xf]
        %v584 = vld [vmem:[#allocation7 + $0x38] sm:$0xf]
        %v585 = vld [vmem:[#allocation7 + $0x3c] sm:$0xf]
        %v602 = vunpack.c.l.b16 %v570
        %v603 = vunpack.c.l.b16 %v571
        %v604 = vunpack.c.l.b16 %v572
        %v605 = vunpack.c.l.b16 %v573
        %v606 = vunpack.c.l.b16 %v574
        %v607 = vunpack.c.l.b16 %v575
        %v608 = vunpack.c.l.b16 %v576
        %v609 = vunpack.c.l.b16 %v577
        %v610 = vunpack.c.l.b16 %v578
        %v611 = vunpack.c.l.b16 %v579
        %v612 = vunpack.c.l.b16 %v580
        %v613 = vunpack.c.l.b16 %v581
        %v614 = vunpack.c.l.b16 %v582
        %v615 = vunpack.c.l.b16 %v583
        %v616 = vunpack.c.l.b16 %v584
        %v617 = vunpack.c.l.b16 %v585
        %v618 = vpack.c.b16 %v603, %v602
        %v619 = vpack.c.b16 %v605, %v604
        %v620 = vpack.c.b16 %v607, %v606
        %v621 = vpack.c.b16 %v609, %v608
        %v622 = vpack.c.b16 %v611, %v610
        %v623 = vpack.c.b16 %v613, %v612
        %v624 = vpack.c.b16 %v615, %v614
        %v625 = vpack.c.b16 %v617, %v616
        %634 = vmatprep.subr.bf16.mxu0 0
        %635 = vmatpush1.bf16.msra.mxu0 %v625
        %636 = vmatprep.subr.bf16.mxu0 0
        %637 = vmatpush1.bf16.msra.mxu0 %v624
        %638 = vmatprep.subr.bf16.mxu0 0
        %639 = vmatpush1.bf16.msra.mxu0 %v623
        %640 = vmatprep.subr.bf16.mxu0 0
        %641 = vmatpush1.bf16.msra.mxu0 %v622
        %642 = vmatprep.subr.bf16.mxu0 0
        %643 = vmatpush1.bf16.msra.mxu0 %v621
        %644 = vmatprep.subr.bf16.mxu0 0
        %645 = vmatpush1.bf16.msra.mxu0 %v620
        %646 = vmatprep.subr.bf16.mxu0 0
        %647 = vmatpush1.bf16.msra.mxu0 %v619
        %648 = vmatprep.subr.bf16.mxu0 0
        %649 = vmatpush1.bf16.msra.mxu0 %v618
        %650 = vmatprep.subr.bf16.mxu0 0
        %651 = vmatpush2.bf16.msra.mxu0 0
        %652 = vmatprep.subr.bf16.mxu0 0
        %653 = vmatpush2.bf16.msra.mxu0 0
        %654 = vmatprep.subr.bf16.mxu0 0
        %655 = vmatpush2.bf16.msra.mxu0 0
        %656 = vmatprep.subr.bf16.mxu0 0
        %657 = vmatpush2.bf16.msra.mxu0 0
        %658 = vmatprep.subr.bf16.mxu0 0
        %659 = vmatpush2.bf16.msra.mxu0 0
        %660 = vmatprep.subr.bf16.mxu0 0
        %661 = vmatpush2.bf16.msra.mxu0 0
        %662 = vmatprep.subr.bf16.mxu0 0
        %663 = vmatpush2.bf16.msra.mxu0 0
        %664 = vmatprep.subr.bf16.mxu0 0
        %665 = vmatpush2.bf16.msra.mxu0 0
        %666 = vmatprep.mubr.bf16.mxu0 0
        %667 = vmatmul.mubr.bf16.gmra.mxu0 %v569
        %v668 = vpop.f32.mrf.mxu0
        %v669 = vadd.f32 0.0, %v668
        %v670 = vpop.f32.mrf.mxu0
        %v671 = vpop.f32.mrf.mxu0
        %v672 = vadd.f32 0.0, %v671
        %v673 = vpop.f32.mrf.mxu0
        %674 = vdwg.mxu0
        %v675 = vpack.c.bf16 %v672, %v669
        %v676 = vpack.c.bf16 %v520, %v516
        %677 = vmatprep.subr.bf16.mxu0 0
        %678 = vmatpush1.bf16.xpose.msra.mxu0 0
        %679 = vmatprep.subr.bf16.mxu0 0
        %680 = vmatpush1.bf16.xpose.msra.mxu0 0
        %681 = vmatprep.subr.bf16.mxu0 0
        %682 = vmatpush1.bf16.xpose.msra.mxu0 0
        %683 = vmatprep.subr.bf16.mxu0 0
        %684 = vmatpush1.bf16.xpose.msra.mxu0 0
        %685 = vmatprep.subr.bf16.mxu0 0
        %686 = vmatpush1.bf16.xpose.msra.mxu0 0
        %687 = vmatprep.subr.bf16.mxu0 0
        %688 = vmatpush1.bf16.xpose.msra.mxu0 0
        %689 = vmatprep.subr.bf16.mxu0 0
        %690 = vmatpush1.bf16.xpose.msra.mxu0 0
        %691 = vmatprep.subr.bf16.mxu0 0
        %692 = vmatpush1.bf16.xpose.msra.mxu0 %v676
        %693 = vmatprep.subr.bf16.mxu0 0
        %694 = vmatpush2.bf16.xpose.msra.mxu0 0
        %695 = vmatprep.subr.bf16.mxu0 0
        %696 = vmatpush2.bf16.xpose.msra.mxu0 0
        %697 = vmatprep.subr.bf16.mxu0 0
        %698 = vmatpush2.bf16.xpose.msra.mxu0 0
        %699 = vmatprep.subr.bf16.mxu0 0
        %700 = vmatpush2.bf16.xpose.msra.mxu0 0
        %701 = vmatprep.subr.bf16.mxu0 0
        %702 = vmatpush2.bf16.xpose.msra.mxu0 0
        %703 = vmatprep.subr.bf16.mxu0 0
        %704 = vmatpush2.bf16.xpose.msra.mxu0 0
        %705 = vmatprep.subr.bf16.mxu0 0
        %706 = vmatpush2.bf16.xpose.msra.mxu0 0
        %707 = vmatprep.subr.bf16.mxu0 0
        %708 = vmatpush2.bf16.xpose.msra.mxu0 0
        %709 = vmatprep.mubr.bf16.mxu0 0
        %710 = vmatmul.mubr.bf16.gmra.mxu0 %v675
        %v711 = vpop.f32.mrf.mxu0
        %v712 = vadd.f32 0.0, %v711
        %v713 = vpop.f32.mrf.mxu0
        %v714 = vpop.f32.mrf.mxu0
        %v715 = vadd.f32 0.0, %v714
        %v716 = vpop.f32.mrf.mxu0
        %717 = vdwg.mxu0
        %v718 = vmul.f32 %v712, 0.17677669
        %v719 = vmul.f32 %v715, 0.17677669
        %vm720 = vcmask 130048
        %v721 = vsel %vm720, %v718, -inf
        %722 = vmax.xlane.f32.xlu0 %v721
        %v723 = vpop.xlane.xlu0 %722
        %v724 = vsel %vm720, %v719, -inf
        %725 = vmax.xlane.f32.xlu0 %v724
        %v726 = vpop.xlane.xlu0 %725
        %v727 = vsub.f32 %v718, %v723
        %v728 = vsub.f32 %v719, %v726
        %v729 = vmul.f32 %v727, 1.442695
        %v730 = vpow.pop %v729
        %v731 = vmul.f32 %v728, 1.442695
        %v732 = vpow.pop %v731
        %v733 = vsel %vm720, %v730, 0.0
        %734 = vadd.xlane.f32.xlu0 %v733
        %v735 = vpop.xlane.xlu0 %734
        %v736 = vsel %vm720, %v732, 0.0
        %737 = vadd.xlane.f32.xlu0 %v736
        %v738 = vpop.xlane.xlu0 %737
        %v739 = vrcp.pop %v735
        %v740 = vmul.f32 %v730, %v739
        %v741 = vrcp.pop %v738
        %v742 = vmul.f32 %v732, %v741
        %v743 = vpack.c.bf16 %v742, %v740
        %v744 = vpack.c.bf16 %v522, %v518
        %v746 = vsel %vm720, %v743, 0
        %748 = vmatprep.subr.bf16.mxu0 0
        %749 = vmatpush1.bf16.msra.mxu0 0
        %750 = vmatprep.subr.bf16.mxu0 0
        %751 = vmatpush1.bf16.msra.mxu0 0
        %752 = vmatprep.subr.bf16.mxu0 0
        %753 = vmatpush1.bf16.msra.mxu0 0
        %754 = vmatprep.subr.bf16.mxu0 0
        %755 = vmatpush1.bf16.msra.mxu0 0
        %756 = vmatprep.subr.bf16.mxu0 0
        %757 = vmatpush1.bf16.msra.mxu0 0
        %758 = vmatprep.subr.bf16.mxu0 0
        %759 = vmatpush1.bf16.msra.mxu0 0
        %760 = vmatprep.subr.bf16.mxu0 0
        %761 = vmatpush1.bf16.msra.mxu0 0
        %762 = vmatprep.subr.bf16.mxu0 0
        %763 = vmatpush1.bf16.msra.mxu0 %v744
        %764 = vmatprep.subr.bf16.mxu0 0
        %765 = vmatpush2.bf16.msra.mxu0 0
        %766 = vmatprep.subr.bf16.mxu0 0
        %767 = vmatpush2.bf16.msra.mxu0 0
        %768 = vmatprep.subr.bf16.mxu0 0
        %769 = vmatpush2.bf16.msra.mxu0 0
        %770 = vmatprep.subr.bf16.mxu0 0
        %771 = vmatpush2.bf16.msra.mxu0 0
        %772 = vmatprep.subr.bf16.mxu0 0
        %773 = vmatpush2.bf16.msra.mxu0 0
        %774 = vmatprep.subr.bf16.mxu0 0
        %775 = vmatpush2.bf16.msra.mxu0 0
        %776 = vmatprep.subr.bf16.mxu0 0
        %777 = vmatpush2.bf16.msra.mxu0 0
        %778 = vmatprep.subr.bf16.mxu0 0
        %779 = vmatpush2.bf16.msra.mxu0 0
        %780 = vmatprep.mubr.bf16.mxu0 0
        %781 = vmatmul.mubr.bf16.gmra.mxu0 %v746
        %v782 = vpop.f32.mrf.mxu0
        %v783 = vadd.f32 %v567, %v782
        %v784 = vpop.f32.mrf.mxu0
        %v785 = vpop.f32.mrf.mxu0
        %v786 = vadd.f32 %v568, %v785
        %v787 = vpop.f32.mrf.mxu0
        %788 = vdwg.mxu0
        %v789 = vpack.c.bf16 %v786, %v783
        %s790 = scalar_lea.vmem [#allocation7], 64
        %v791 = vld [vmem:[%s790] sm:$0xf]
        %v792 = vld [vmem:[%s790 + $0x4] sm:$0xf]
        %v793 = vld [vmem:[%s790 + $0x8] sm:$0xf]
        %v794 = vld [vmem:[%s790 + $0xc] sm:$0xf]
        %v795 = vld [vmem:[%s790 + $0x10] sm:$0xf]
        %v796 = vld [vmem:[%s790 + $0x14] sm:$0xf]
        %v797 = vld [vmem:[%s790 + $0x18] sm:$0xf]
        %v798 = vld [vmem:[%s790 + $0x1c] sm:$0xf]
        %v799 = vld [vmem:[%s790 + $0x20] sm:$0xf]
        %v800 = vld [vmem:[%s790 + $0x24] sm:$0xf]
        %v801 = vld [vmem:[%s790 + $0x28] sm:$0xf]
        %v802 = vld [vmem:[%s790 + $0x2c] sm:$0xf]
        %v803 = vld [vmem:[%s790 + $0x30] sm:$0xf]
        %v804 = vld [vmem:[%s790 + $0x34] sm:$0xf]
        %v805 = vld [vmem:[%s790 + $0x38] sm:$0xf]
        %v806 = vld [vmem:[%s790 + $0x3c] sm:$0xf]
        %v823 = vunpack.c.l.b16 %v791
        %v824 = vunpack.c.l.b16 %v792
        %v825 = vunpack.c.l.b16 %v793
        %v826 = vunpack.c.l.b16 %v794
        %v827 = vunpack.c.l.b16 %v795
        %v828 = vunpack.c.l.b16 %v796
        %v829 = vunpack.c.l.b16 %v797
        %v830 = vunpack.c.l.b16 %v798
        %v831 = vunpack.c.l.b16 %v799
        %v832 = vunpack.c.l.b16 %v800
        %v833 = vunpack.c.l.b16 %v801
        %v834 = vunpack.c.l.b16 %v802
        %v835 = vunpack.c.l.b16 %v803
        %v836 = vunpack.c.l.b16 %v804
        %v837 = vunpack.c.l.b16 %v805
        %v838 = vunpack.c.l.b16 %v806
        %v839 = vpack.c.b16 %v824, %v823
        %v840 = vpack.c.b16 %v826, %v825
        %v841 = vpack.c.b16 %v828, %v827
        %v842 = vpack.c.b16 %v830, %v829
        %v843 = vpack.c.b16 %v832, %v831
        %v844 = vpack.c.b16 %v834, %v833
        %v845 = vpack.c.b16 %v836, %v835
        %v846 = vpack.c.b16 %v838, %v837
        %855 = vmatprep.subr.bf16.mxu0 0
        %856 = vmatpush1.bf16.msra.mxu0 %v846
        %857 = vmatprep.subr.bf16.mxu0 0
        %858 = vmatpush1.bf16.msra.mxu0 %v845
        %859 = vmatprep.subr.bf16.mxu0 0
        %860 = vmatpush1.bf16.msra.mxu0 %v844
        %861 = vmatprep.subr.bf16.mxu0 0
        %862 = vmatpush1.bf16.msra.mxu0 %v843
        %863 = vmatprep.subr.bf16.mxu0 0
        %864 = vmatpush1.bf16.msra.mxu0 %v842
        %865 = vmatprep.subr.bf16.mxu0 0
        %866 = vmatpush1.bf16.msra.mxu0 %v841
        %867 = vmatprep.subr.bf16.mxu0 0
        %868 = vmatpush1.bf16.msra.mxu0 %v840
        %869 = vmatprep.subr.bf16.mxu0 0
        %870 = vmatpush1.bf16.msra.mxu0 %v839
        %871 = vmatprep.subr.bf16.mxu0 0
        %872 = vmatpush2.bf16.msra.mxu0 0
        %873 = vmatprep.subr.bf16.mxu0 0
        %874 = vmatpush2.bf16.msra.mxu0 0
        %875 = vmatprep.subr.bf16.mxu0 0
        %876 = vmatpush2.bf16.msra.mxu0 0
        %877 = vmatprep.subr.bf16.mxu0 0
        %878 = vmatpush2.bf16.msra.mxu0 0
        %879 = vmatprep.subr.bf16.mxu0 0
        %880 = vmatpush2.bf16.msra.mxu0 0
        %881 = vmatprep.subr.bf16.mxu0 0
        %882 = vmatpush2.bf16.msra.mxu0 0
        %883 = vmatprep.subr.bf16.mxu0 0
        %884 = vmatpush2.bf16.msra.mxu0 0
        %885 = vmatprep.subr.bf16.mxu0 0
        %886 = vmatpush2.bf16.msra.mxu0 0
        %887 = vmatprep.mubr.bf16.mxu0 0
        %888 = vmatmul.mubr.bf16.gmra.mxu0 %v789
        %v889 = vpop.f32.mrf.mxu0
        %v890 = vadd.f32 0.0, %v889
        %v891 = vpop.f32.mrf.mxu0
        %v892 = vpop.f32.mrf.mxu0
        %v893 = vadd.f32 0.0, %v892
        %v894 = vpop.f32.mrf.mxu0
        %895 = vdwg.mxu0
        %v896 = vpack.c.bf16 %v893, %v890
        %v897 = vpack.c.bf16 %v563, %v559
        %898 = vmatprep.subr.bf16.mxu0 0
        %899 = vmatpush1.bf16.xpose.msra.mxu0 0
        %900 = vmatprep.subr.bf16.mxu0 0
        %901 = vmatpush1.bf16.xpose.msra.mxu0 0
        %902 = vmatprep.subr.bf16.mxu0 0
        %903 = vmatpush1.bf16.xpose.msra.mxu0 0
        %904 = vmatprep.subr.bf16.mxu0 0
        %905 = vmatpush1.bf16.xpose.msra.mxu0 0
        %906 = vmatprep.subr.bf16.mxu0 0
        %907 = vmatpush1.bf16.xpose.msra.mxu0 0
        %908 = vmatprep.subr.bf16.mxu0 0
        %909 = vmatpush1.bf16.xpose.msra.mxu0 0
        %910 = vmatprep.subr.bf16.mxu0 0
        %911 = vmatpush1.bf16.xpose.msra.mxu0 0
        %912 = vmatprep.subr.bf16.mxu0 0
        %913 = vmatpush1.bf16.xpose.msra.mxu0 %v897
        %914 = vmatprep.subr.bf16.mxu0 0
        %915 = vmatpush2.bf16.xpose.msra.mxu0 0
        %916 = vmatprep.subr.bf16.mxu0 0
        %917 = vmatpush2.bf16.xpose.msra.mxu0 0
        %918 = vmatprep.subr.bf16.mxu0 0
        %919 = vmatpush2.bf16.xpose.msra.mxu0 0
        %920 = vmatprep.subr.bf16.mxu0 0
        %921 = vmatpush2.bf16.xpose.msra.mxu0 0
        %922 = vmatprep.subr.bf16.mxu0 0
        %923 = vmatpush2.bf16.xpose.msra.mxu0 0
        %924 = vmatprep.subr.bf16.mxu0 0
        %925 = vmatpush2.bf16.xpose.msra.mxu0 0
        %926 = vmatprep.subr.bf16.mxu0 0
        %927 = vmatpush2.bf16.xpose.msra.mxu0 0
        %928 = vmatprep.subr.bf16.mxu0 0
        %929 = vmatpush2.bf16.xpose.msra.mxu0 0
        %930 = vmatprep.mubr.bf16.mxu0 0
        %931 = vmatmul.mubr.bf16.gmra.mxu0 %v896
        %v932 = vpop.f32.mrf.mxu0
        %v933 = vadd.f32 0.0, %v932
        %v934 = vpop.f32.mrf.mxu0
        %v935 = vpop.f32.mrf.mxu0
        %v936 = vadd.f32 0.0, %v935
        %v937 = vpop.f32.mrf.mxu0
        %938 = vdwg.mxu0
        %v939 = vmul.f32 %v933, 0.17677669
        %v940 = vmul.f32 %v936, 0.17677669
        %v941 = vsel %vm720, %v939, -inf
        %942 = vmax.xlane.f32.xlu0 %v941
        %v943 = vpop.xlane.xlu0 %942
        %v944 = vsel %vm720, %v940, -inf
        %945 = vmax.xlane.f32.xlu0 %v944
        %v946 = vpop.xlane.xlu0 %945
        %v947 = vsub.f32 %v939, %v943
        %v948 = vsub.f32 %v940, %v946
        %v949 = vmul.f32 %v947, 1.442695
        %v950 = vpow.pop %v949
        %v951 = vmul.f32 %v948, 1.442695
        %v952 = vpow.pop %v951
        %v953 = vsel %vm720, %v950, 0.0
        %954 = vadd.xlane.f32.xlu0 %v953
        %v955 = vpop.xlane.xlu0 %954
        %v956 = vsel %vm720, %v952, 0.0
        %957 = vadd.xlane.f32.xlu0 %v956
        %v958 = vpop.xlane.xlu0 %957
        %v959 = vrcp.pop %v955
        %v960 = vmul.f32 %v950, %v959
        %v961 = vrcp.pop %v958
        %v962 = vmul.f32 %v952, %v961
        %v963 = vpack.c.bf16 %v962, %v960
        %v964 = vpack.c.bf16 %v565, %v561
        %v966 = vsel %vm720, %v963, 0
        %968 = vmatprep.subr.bf16.mxu0 0
        %969 = vmatpush1.bf16.msra.mxu0 0
        %970 = vmatprep.subr.bf16.mxu0 0
        %971 = vmatpush1.bf16.msra.mxu0 0
        %972 = vmatprep.subr.bf16.mxu0 0
        %973 = vmatpush1.bf16.msra.mxu0 0
        %974 = vmatprep.subr.bf16.mxu0 0
        %975 = vmatpush1.bf16.msra.mxu0 0
        %976 = vmatprep.subr.bf16.mxu0 0
        %977 = vmatpush1.bf16.msra.mxu0 0
        %978 = vmatprep.subr.bf16.mxu0 0
        %979 = vmatpush1.bf16.msra.mxu0 0
        %980 = vmatprep.subr.bf16.mxu0 0
        %981 = vmatpush1.bf16.msra.mxu0 0
        %982 = vmatprep.subr.bf16.mxu0 0
        %983 = vmatpush1.bf16.msra.mxu0 %v964
        %984 = vmatprep.subr.bf16.mxu0 0
        %985 = vmatpush2.bf16.msra.mxu0 0
        %986 = vmatprep.subr.bf16.mxu0 0
        %987 = vmatpush2.bf16.msra.mxu0 0
        %988 = vmatprep.subr.bf16.mxu0 0
        %989 = vmatpush2.bf16.msra.mxu0 0
        %990 = vmatprep.subr.bf16.mxu0 0
        %991 = vmatpush2.bf16.msra.mxu0 0
        %992 = vmatprep.subr.bf16.mxu0 0
        %993 = vmatpush2.bf16.msra.mxu0 0
        %994 = vmatprep.subr.bf16.mxu0 0
        %995 = vmatpush2.bf16.msra.mxu0 0
        %996 = vmatprep.subr.bf16.mxu0 0
        %997 = vmatpush2.bf16.msra.mxu0 0
        %998 = vmatprep.subr.bf16.mxu0 0
        %999 = vmatpush2.bf16.msra.mxu0 0
        %1000 = vmatprep.mubr.bf16.mxu0 0
        %1001 = vmatmul.mubr.bf16.gmra.mxu0 %v966
        %v1002 = vpop.f32.mrf.mxu0
        %v1003 = vadd.f32 %v783, %v1002
        %v1004 = vpop.f32.mrf.mxu0
        %v1005 = vpop.f32.mrf.mxu0
        %v1006 = vadd.f32 %v786, %v1005
        %v1007 = vpop.f32.mrf.mxu0
        %1008 = vdwg.mxu0
        %1009 = vst [vmem:[%s284] sm:$0xff] %v1003
        %1010 = vst [vmem:[%s284 + $0x8] sm:$0xff] %v1006
        %s1011 = sand.u32 %s127, 1
        %s1012 = scalar_lea.sflag [#allocation4], %s1011
        %s1013 = sand.u32 %s127, 1
        %s1014 = smul.addr %s1013, 16
        %s1015 = scalar_lea.vmem [#allocation10], %s1014
        // Predicated region
        $region53: #{tpu_custom_call.1} parent=35 // pred_check
          %p1016 = pneg %p137
        $region54: #{tpu_custom_call.1} parent=35 // pred_check_branch
          %1018 = sbr.rel (%p1016) target = $region56
        $region55: #{tpu_custom_call.1} parent=35 // pred_region
          %s1020 = ssub.s32 256, 256
          %1021 = vsyncadd %s1012, %s1020
          %s1022 = smul.addr %s25, 2
          %s1023 = smul.addr %s1022, 128
          %s1024 = scalar_lea.hbm %s4, %s1023
          %s1025 = sshll.u32 %s1015, 4
          %s1026 = int_to_ptr.vmem [resolvable:$true] %s1025
          %1031 = dma.vmem_to_hbm [thread:$0]  %s1026, 256, %s1024, %s1012, 128, 128, 8
        $region56: #{tpu_custom_call.1} parent=35 // pred_fallthru
          _
      $region36: #{tpu_custom_call.1} parent=5 // pred_fallthru
        _
      %p1032 = scmp.le.s32.totalorder 2, %s20
      // Predicated region
      $region57: #{tpu_custom_call.1} parent=5 // pred_check
        %p1033 = pneg %p1032
      $region58: #{tpu_custom_call.1} parent=5 // pred_check_branch
        %1035 = sbr.rel (%p1033) target = $region60
      $region59: #{tpu_custom_call.1} parent=5 // pred_region
        %s1036 = ssub.s32 %s20, 2
        // Predicated region
        $region61: #{tpu_custom_call.1} parent=59 // pred_check
          %p1037 = pneg %p143
        $region62: #{tpu_custom_call.1} parent=59 // pred_check_branch
          %1039 = sbr.rel (%p1037) target = $region64
        $region63: #{tpu_custom_call.1} parent=59 // pred_region
          %s1040 = sand.u32 %s128, 1
          %s1041 = scalar_lea.sflag [#allocation4], %s1040
          %s1042 = sand.u32 %s128, 1
          %s1043 = smul.addr %s1042, 16
          %s1044 = scalar_lea.vmem [#allocation10], %s1043
          %1045 = dma.done %s1041, 256
        $region64: #{tpu_custom_call.1} parent=59 // pred_fallthru
          _
      $region60: #{tpu_custom_call.1} parent=5 // pred_fallthru
        _
    $region6: #{tpu_custom_call.1} parent=1 // loop_footer
      %s24 = sadd.s32 1, %s20
    $region7: #{tpu_custom_call.1} parent=1 // loop_footer_branch
      %19 = sbr.rel target = $region3
    $region8: #{tpu_custom_call.1} parent=1 // loop_exit
      _
    %1046 = vsyncpa [#allocation3], 1
    %s1047 = scalar_lea.sflag [#allocation3], 1
    %1048 = vsyncpa %s1047, 1
    %1049 = vsyncpa [#allocation6], 1
    %s1050 = scalar_lea.sflag [#allocation6], 1
    %1051 = vsyncpa %s1050, 1
    %1052 = vsyncpa [#allocation9], 1
    %1053 = vsyncpa [#allocation4], 1
    %s1054 = scalar_lea.sflag [#allocation4], 1
    %1055 = vsyncpa %s1054, 1

</llo_original>
